<compile_context>
chip_gen: v5e
topology: v5e:2x2
jax: 0.10.0
libtpu: 0.0.40
codegen_flags: <defaults>
</compile_context>

<pallas_src>
import jax
import jax.numpy as jnp
from jax.experimental import pallas as pl
from jax.experimental.pallas import tpu as pltpu


def _decoder_block_kernel(p_ref, w_ref, shift_ref, u_ref, o_ref):
    # p_ref    : (9*Cin, N*HW)  im2col patches; K tap-major/cin-minor,
    #                           lanes ordered (n, h, w)
    # w_ref    : (Cout, 9*Cin)  conv weight with BN scale folded in
    # shift_ref: (Cout, 1)      folded BN shift = beta - mean*gamma/sqrt(var+eps)
    # u_ref    : (HW, 4*HW)     constant one-hot nearest-2x upsample matrix
    # o_ref    : (N, Cout, 4*HW) conv+BN+ReLU+upsample, lane-dense; reshapes
    #                            bit-identically to NCHW (N, Cout, 2H, 2W)
    n_batch = o_ref.shape[0]
    hw = u_ref.shape[0]

    # One K=9*Cin matmul covering all batch elements (lane-dense: N*HW lanes).
    y = jnp.dot(w_ref[...], p_ref[...], preferred_element_type=jnp.float32)
    y = jnp.maximum(y + shift_ref[...], 0.0)          # BN shift + ReLU, (Cout, N*HW)

    # Fused nearest-2x upsample: per batch element, one (Cout,HW)x(HW,4HW) matmul
    # against the exact 0/1 duplication matrix (MXU is otherwise idle -> free).
    u = u_ref[...]
    for n in range(n_batch):                           # static unroll, N is tiny
        o_ref[n] = jnp.dot(y[:, n * hw:(n + 1) * hw], u,
                           preferred_element_type=jnp.float32).astype(o_ref.dtype)


def decoder_block_forward(x_nchw, w_oihw, gamma, beta, running_mean,
                          running_var, eps=1e-5, mxu_dtype=jnp.float32):
    """Pallas implementation of DecoderBlock.forward (upsample_mode='up').

    BatchNorm uses inference-mode (running) statistics, the standard deployed
    semantics of nn.BatchNorm2d. mxu_dtype=jnp.bfloat16 halves operand DMA
    bytes on every TPU generation (f32 accumulation kept) at ~1e-3 rel error.
    """
    N, Cin, H, W = x_nchw.shape
    Cout = w_oihw.shape[0]
    HW = H * W
    K = 9 * Cin

    x = x_nchw.astype(jnp.float32)
    # ReplicationPad2d(1)
    xp = jnp.pad(x, ((0, 0), (0, 0), (1, 1), (1, 1)), mode="edge")

    # im2col -> (9*Cin, N*HW); rows ordered (tap, cin) with tap = ky*3 + kx,
    # lanes ordered (n, h, w) so the kernel's per-n lane slices are batch blocks.
    taps = [xp[:, :, ky:ky + H, kx:kx + W]
            for ky in range(3) for kx in range(3)]
    patches = jnp.stack(taps, axis=0)                       # (9, N, Cin, H, W)
    patches = patches.transpose(0, 2, 1, 3, 4).reshape(K, N * HW)

    # Fold BN affine: y = scale * conv(x) + shift, with scale folded into w.
    inv_std = 1.0 / jnp.sqrt(running_var.astype(jnp.float32) + eps)
    scale = gamma.astype(jnp.float32) * inv_std
    shift = (beta.astype(jnp.float32)
             - running_mean.astype(jnp.float32) * scale)

    # (Cout, Cin, 3, 3) -> (Cout, 9*Cin) ordered (tap, cin) to match patches.
    w2 = jnp.transpose(w_oihw.astype(jnp.float32), (0, 2, 3, 1)).reshape(Cout, K)
    w_folded = (w2 * scale[:, None]).astype(mxu_dtype)
    shift_col = shift.reshape(Cout, 1)
    patches = patches.astype(mxu_dtype)

    # Constant one-hot nearest-neighbour 2x upsample matrix: U[s, m] = 1 iff
    # source flat index s == (m//(2W))//2 * W + (m%(2W))//2.  Kept in f32 so
    # the duplication is exact regardless of mxu_dtype.
    oh = jnp.arange(2 * H)[:, None]
    ow = jnp.arange(2 * W)[None, :]
    src = ((oh // 2) * W + (ow // 2)).reshape(1, 4 * HW)
    up_mat = (jnp.arange(HW)[:, None] == src).astype(jnp.float32)

    y = pl.pallas_call(
        _decoder_block_kernel,
        out_shape=jax.ShapeDtypeStruct((N, Cout, 4 * HW), jnp.float32),
        grid=(1,),
        in_specs=[
            pl.BlockSpec((K, N * HW), lambda i: (0, 0)),
            pl.BlockSpec((Cout, K), lambda i: (0, 0)),
            pl.BlockSpec((Cout, 1), lambda i: (0, 0)),
            pl.BlockSpec((HW, 4 * HW), lambda i: (0, 0)),
        ],
        out_specs=pl.BlockSpec((N, Cout, 4 * HW), lambda i: (0, 0, 0)),
        compiler_params=pltpu.CompilerParams(
            dimension_semantics=("arbitrary",)),
    )(patches, w_folded, shift_col, up_mat)

    # (N, Cout, 4*HW) -> (N, Cout, 2H, 2W): layout-preserving, already NCHW.
    return y.reshape(N, Cout, 2 * H, 2 * W)


def _reference_forward(x_nchw, w_oihw, gamma, beta, running_mean,
                       running_var, eps=1e-5):
    """Pure-JAX reference (mirrors the PyTorch module, eval-mode BN)."""
    xp = jnp.pad(x_nchw, ((0, 0), (0, 0), (1, 1), (1, 1)), mode="edge")
    y = jax.lax.conv_general_dilated(
        xp.astype(jnp.float32), w_oihw.astype(jnp.float32),
        window_strides=(1, 1), padding="VALID",
        dimension_numbers=("NCHW", "OIHW", "NCHW"))
    inv_std = 1.0 / jnp.sqrt(running_var + eps)
    scale = (gamma * inv_std)[None, :, None, None]
    shift = (beta - running_mean * gamma * inv_std)[None, :, None, None]
    y = jnp.maximum(y * scale + shift, 0.0)
    y = jnp.repeat(jnp.repeat(y, 2, axis=2), 2, axis=3)
    return y


if __name__ == "__main__":
    # Small shapes consistent with the module: N=2, Cin=4, Cout=8, 16x16 spatial.
    N, Cin, Cout, H, W = 2, 4, 8, 16, 16

    key = jax.random.PRNGKey(0)
    k_x, k_w, k_g, k_b, k_m, k_v = jax.random.split(key, 6)

    x = jax.random.normal(k_x, (N, Cin, H, W), dtype=jnp.float32)

    # Deterministic synthetic parameters (Conv2d weight OIHW, BN params).
    w = jax.random.normal(k_w, (Cout, Cin, 3, 3), dtype=jnp.float32) * 0.2
    gamma = 1.0 + 0.1 * jax.random.normal(k_g, (Cout,), dtype=jnp.float32)
    beta = 0.05 * jax.random.normal(k_b, (Cout,), dtype=jnp.float32)
    running_mean = 0.1 * jax.random.normal(k_m, (Cout,), dtype=jnp.float32)
    running_var = 0.5 + jax.random.uniform(k_v, (Cout,), dtype=jnp.float32)

    fwd = jax.jit(decoder_block_forward)
    out = jax.block_until_ready(
        fwd(x, w, gamma, beta, running_mean, running_var))

    ref = jax.block_until_ready(
        _reference_forward(x, w, gamma, beta, running_mean, running_var))

    assert out.shape == (N, Cout, 2 * H, 2 * W), out.shape
    assert jnp.allclose(out, ref, atol=1e-4, rtol=1e-4), (
        float(jnp.max(jnp.abs(out - ref))))

    print("KERNEL_OK")
</pallas_src>

<mosaic_0001>
module attributes {stable_mosaic.version = 11 : i64} {
  func.func @_decoder_block_kernel(%arg0: i32, %arg1: memref<36x512xf32, #tpu.memory_space<vmem>>, %arg2: memref<8x36xf32, #tpu.memory_space<vmem>>, %arg3: memref<8x1xf32, #tpu.memory_space<vmem>>, %arg4: memref<256x1024xf32, #tpu.memory_space<vmem>>, %arg5: memref<2x8x1024xf32, #tpu.memory_space<vmem>>) attributes {dimension_semantics = [#tpu.dimension_semantics<arbitrary>], iteration_bounds = array<i64: 1>, scalar_prefetch = 0 : i64, scratch_operands = 0 : i64, tpu.core_type = #tpu.core_type<tc>, window_params = [{pipeline_mode = #tpu.pipeline_mode<synchronous>, transform_indices = @transform_0, window_bounds = array<i64: 36, 512>}, {pipeline_mode = #tpu.pipeline_mode<synchronous>, transform_indices = @transform_1, window_bounds = array<i64: 8, 36>}, {pipeline_mode = #tpu.pipeline_mode<synchronous>, transform_indices = @transform_2, window_bounds = array<i64: 8, 1>}, {pipeline_mode = #tpu.pipeline_mode<synchronous>, transform_indices = @transform_3, window_bounds = array<i64: 256, 1024>}, {pipeline_mode = #tpu.pipeline_mode<synchronous>, transform_indices = @transform_4, window_bounds = array<i64: 2, 8, 1024>}]} {
    %c0 = arith.constant 0 : index
    %c0_0 = arith.constant 0 : index
    %0 = vector.load %arg2[%c0, %c0_0] : memref<8x36xf32, #tpu.memory_space<vmem>>, vector<8x36xf32>
    %c0_1 = arith.constant 0 : index
    %c0_2 = arith.constant 0 : index
    %1 = vector.load %arg1[%c0_1, %c0_2] : memref<36x512xf32, #tpu.memory_space<vmem>>, vector<36x512xf32>
    %cst = arith.constant dense<0.000000e+00> : vector<8x512xf32>
    %2 = tpu.matmul %0, %1, %cst {dimension_numbers = #tpu.dot_dimension_numbers<[1], [0], [0], [1], [0, 0, 1, 1], [], []>} : vector<8x36xf32>, vector<36x512xf32>, vector<8x512xf32> -> vector<8x512xf32>
    %c0_3 = arith.constant 0 : index
    %c0_4 = arith.constant 0 : index
    %3 = vector.load %arg3[%c0_3, %c0_4] : memref<8x1xf32, #tpu.memory_space<vmem>>, vector<8x1xf32>
    %4 = vector.broadcast %3 : vector<8x1xf32> to vector<8x512xf32>
    %5 = arith.addf %2, %4 : vector<8x512xf32>
    %cst_5 = arith.constant 0.000000e+00 : f32
    %6 = vector.broadcast %cst_5 : f32 to vector<8x512xf32>
    %7 = arith.maximumf %5, %6 : vector<8x512xf32>
    %c0_6 = arith.constant 0 : index
    %c0_7 = arith.constant 0 : index
    %8 = vector.load %arg4[%c0_6, %c0_7] : memref<256x1024xf32, #tpu.memory_space<vmem>>, vector<256x1024xf32>
    %9 = vector.extract_strided_slice %7 {offsets = [0, 0], sizes = [8, 256], strides = [1, 1]} : vector<8x512xf32> to vector<8x256xf32>
    %cst_8 = arith.constant dense<0.000000e+00> : vector<8x1024xf32>
    %10 = tpu.matmul %9, %8, %cst_8 {dimension_numbers = #tpu.dot_dimension_numbers<[1], [0], [0], [1], [0, 0, 1, 1], [], []>} : vector<8x256xf32>, vector<256x1024xf32>, vector<8x1024xf32> -> vector<8x1024xf32>
    %c0_9 = arith.constant 0 : index
    %c0_10 = arith.constant 0 : index
    %c0_11 = arith.constant 0 : index
    %11 = vector.load %arg5[%c0_9, %c0_10, %c0_11] : memref<2x8x1024xf32, #tpu.memory_space<vmem>>, vector<1x8x1024xf32>
    %12 = vector.shape_cast %11 : vector<1x8x1024xf32> to vector<8x1024xf32>
    %13 = vector.shape_cast %10 : vector<8x1024xf32> to vector<1x8x1024xf32>
    tpu.vector_store %arg5[%c0_9, %c0_10, %c0_11], %13 {strides = array<i32>} : memref<2x8x1024xf32, #tpu.memory_space<vmem>>, vector<1x8x1024xf32>,
    %14 = vector.extract_strided_slice %7 {offsets = [0, 256], sizes = [8, 256], strides = [1, 1]} : vector<8x512xf32> to vector<8x256xf32>
    %cst_12 = arith.constant dense<0.000000e+00> : vector<8x1024xf32>
    %15 = tpu.matmul %14, %8, %cst_12 {dimension_numbers = #tpu.dot_dimension_numbers<[1], [0], [0], [1], [0, 0, 1, 1], [], []>} : vector<8x256xf32>, vector<256x1024xf32>, vector<8x1024xf32> -> vector<8x1024xf32>
    %c1 = arith.constant 1 : index
    %c0_13 = arith.constant 0 : index
    %c0_14 = arith.constant 0 : index
    %16 = vector.load %arg5[%c1, %c0_13, %c0_14] : memref<2x8x1024xf32, #tpu.memory_space<vmem>>, vector<1x8x1024xf32>
    %17 = vector.shape_cast %16 : vector<1x8x1024xf32> to vector<8x1024xf32>
    %18 = vector.shape_cast %15 : vector<8x1024xf32> to vector<1x8x1024xf32>
    tpu.vector_store %arg5[%c1, %c0_13, %c0_14], %18 {strides = array<i32>} : memref<2x8x1024xf32, #tpu.memory_space<vmem>>, vector<1x8x1024xf32>,
    return
  }
  func.func @transform_0(%arg0: i32) -> (i32, i32) {
    %c0_i32 = arith.constant 0 : i32
    %c0_i32_0 = arith.constant 0 : i32
    %c0_i32_1 = arith.constant 0 : i32
    return %c0_i32, %c0_i32_0 : i32, i32
  }
  func.func @transform_1(%arg0: i32) -> (i32, i32) {
    %c0_i32 = arith.constant 0 : i32
    %c0_i32_0 = arith.constant 0 : i32
    %c0_i32_1 = arith.constant 0 : i32
    return %c0_i32, %c0_i32_0 : i32, i32
  }
  func.func @transform_2(%arg0: i32) -> (i32, i32) {
    %c0_i32 = arith.constant 0 : i32
    %c0_i32_0 = arith.constant 0 : i32
    %c0_i32_1 = arith.constant 0 : i32
    return %c0_i32, %c0_i32_0 : i32, i32
  }
  func.func @transform_3(%arg0: i32) -> (i32, i32) {
    %c0_i32 = arith.constant 0 : i32
    %c0_i32_0 = arith.constant 0 : i32
    %c0_i32_1 = arith.constant 0 : i32
    return %c0_i32, %c0_i32_0 : i32, i32
  }
  func.func @transform_4(%arg0: i32) -> (i32, i32, i32) {
    %c0_i32 = arith.constant 0 : i32
    %c0_i32_0 = arith.constant 0 : i32
    %c0_i32_1 = arith.constant 0 : i32
    %c0_i32_2 = arith.constant 0 : i32
    return %c0_i32, %c0_i32_0, %c0_i32_1 : i32, i32, i32
  }
}

</mosaic_0001>

<llo_original>
// kernel: decoder_block_forward.1
$region0: #{decoder_block_forward.1}
  #allocation0 [shape = 'u32[]', space=smem, size = 0x4, offset = 0x4, fixed_abs, tag = 'smem constant byte address 0x4 - core index']
  #allocation1 [shape = 'u32[72,128]{1,0:T(1,128)}', space=vmem, size = 0x9000, scoped, tag = 'internal scratch']
  %s0 = inlined_call_operand.vmem [shape: f32[36,512], index: 0, kind: input, shape index: {}]
  %s1 = inlined_call_operand.vmem [shape: f32[8,36], index: 1, kind: input, shape index: {}]
  %s2 = inlined_call_operand.vmem [shape: f32[8,1], index: 2, kind: input, shape index: {}]
  %s3 = inlined_call_operand.vmem [shape: f32[256,1024], index: 3, kind: input, shape index: {}]
  %s4 = inlined_call_operand.vmem [shape: f32[2,8,1024], index: 4, kind: output, shape index: {}]
  %s5 = sld [smem:[#allocation0]]
  $region26: #{decoder_block_forward.1} parent=0
    _
  %s7 = ssub.s32 1, %s5
  %s8 = scalar_select 0, %s7, %s5
  // Predicated region
  $region2: #{decoder_block_forward.1} parent=0 // pred_check
    _
  $region3: #{decoder_block_forward.1} parent=0 // pred_check_branch
    %10 = sbr.rel (0) target = $region5
  $region4: #{decoder_block_forward.1} parent=0 // pred_region
    _
  $region5: #{decoder_block_forward.1} parent=0 // pred_fallthru
    _
  // Predicated region
  $region6: #{decoder_block_forward.1} parent=0 // pred_check
    _
  $region7: #{decoder_block_forward.1} parent=0 // pred_check_branch
    %12 = sbr.rel (0) target = $region9
  $region8: #{decoder_block_forward.1} parent=0 // pred_region
    _
  $region9: #{decoder_block_forward.1} parent=0 // pred_fallthru
    _
  // Predicated region
  $region10: #{decoder_block_forward.1} parent=0 // pred_check
    _
  $region11: #{decoder_block_forward.1} parent=0 // pred_check_branch
    %14 = sbr.rel (0) target = $region13
  $region12: #{decoder_block_forward.1} parent=0 // pred_region
    _
  $region13: #{decoder_block_forward.1} parent=0 // pred_fallthru
    _
  // Predicated region
  $region14: #{decoder_block_forward.1} parent=0 // pred_check
    _
  $region15: #{decoder_block_forward.1} parent=0 // pred_check_branch
    %16 = sbr.rel (0) target = $region17
  $region16: #{decoder_block_forward.1} parent=0 // pred_region
    _
  $region17: #{decoder_block_forward.1} parent=0 // pred_fallthru
    _
  %v17 = vld [vmem:[%s1] sm:$0xff]
  %v18 = vld [vmem:[%s0] sm:$0xff]
  %v19 = vld [vmem:[%s0 + $0x8] sm:$0xff]
  %v20 = vld [vmem:[%s0 + $0x10] sm:$0xff]
  %v21 = vld [vmem:[%s0 + $0x18] sm:$0xff]
  %v22 = vld [vmem:[%s0 + $0x20] sm:$0xff]
  %v23 = vld [vmem:[%s0 + $0x28] sm:$0xff]
  %v24 = vld [vmem:[%s0 + $0x30] sm:$0xff]
  %v25 = vld [vmem:[%s0 + $0x38] sm:$0xff]
  %v26 = vld [vmem:[%s0 + $0x40] sm:$0xff]
  %v27 = vld [vmem:[%s0 + $0x48] sm:$0xff]
  %v28 = vld [vmem:[%s0 + $0x50] sm:$0xff]
  %v29 = vld [vmem:[%s0 + $0x58] sm:$0xff]
  %v30 = vld [vmem:[%s0 + $0x60] sm:$0xff]
  %v31 = vld [vmem:[%s0 + $0x68] sm:$0xff]
  %v32 = vld [vmem:[%s0 + $0x70] sm:$0xff]
  %v33 = vld [vmem:[%s0 + $0x78] sm:$0xff]
  %v34 = vld [vmem:[%s0 + $0x80] sm:$0xf]
  %v35 = vld [vmem:[%s0 + $0x88] sm:$0xf]
  %v36 = vld [vmem:[%s0 + $0x90] sm:$0xf]
  %v37 = vld [vmem:[%s0 + $0x98] sm:$0xf]
  %v38 = vld [vmem:[%s2] sm:$0xff]
  %40 = vset.pattern.permute.xlu0 0
  %41 = vperm.xlu0 %40, %v38
  %v42 = vpop.permute.xlu0 %41
  %vm44 = vcmask 293888
  %v46 = vsel %vm44, %v17, 0
  %vm48 = vcmask 1043456
  %v50 = vsel %vm48, %v34, 0
  %v53 = vsel %vm48, %v35, 0
  %v56 = vsel %vm48, %v36, 0
  %v59 = vsel %vm48, %v37, 0
  %61 = vmatpush.msra.mxu0 0.0
  %62 = vmatpush.msra.mxu0 0.0
  %63 = vmatpush.msra.mxu0 0.0
  %64 = vmatpush.msra.mxu0 0.0
  %65 = vmatpush.msra.mxu0 0.0
  %66 = vmatpush.msra.mxu0 0.0
  %67 = vmatpush.msra.mxu0 0.0
  %68 = vmatpush.msra.mxu0 0.0
  %69 = vmatpush.msra.mxu0 0.0
  %70 = vmatpush.msra.mxu0 0.0
  %71 = vmatpush.msra.mxu0 0.0
  %72 = vmatpush.msra.mxu0 %v50
  %73 = vmatpush.msra.mxu0 %v30
  %74 = vmatpush.msra.mxu0 %v26
  %75 = vmatpush.msra.mxu0 %v22
  %76 = vmatpush.msra.mxu0 %v18
  %77 = vmatmul.f32.gmra.mxu0 %v46
  %v78 = vpop.f32.mrf.mxu0
  %v79 = vadd.f32 %v42, %v78
  %80 = vdwg.mxu0
  %81 = vmatpush.msra.mxu0 0.0
  %82 = vmatpush.msra.mxu0 0.0
  %83 = vmatpush.msra.mxu0 0.0
  %84 = vmatpush.msra.mxu0 0.0
  %85 = vmatpush.msra.mxu0 0.0
  %86 = vmatpush.msra.mxu0 0.0
  %87 = vmatpush.msra.mxu0 0.0
  %88 = vmatpush.msra.mxu0 0.0
  %89 = vmatpush.msra.mxu0 0.0
  %90 = vmatpush.msra.mxu0 0.0
  %91 = vmatpush.msra.mxu0 0.0
  %92 = vmatpush.msra.mxu0 %v53
  %93 = vmatpush.msra.mxu0 %v31
  %94 = vmatpush.msra.mxu0 %v27
  %95 = vmatpush.msra.mxu0 %v23
  %96 = vmatpush.msra.mxu0 %v19
  %97 = vmatmul.f32.gmra.mxu0 %v46
  %v98 = vpop.f32.mrf.mxu0
  %v99 = vadd.f32 %v42, %v98
  %100 = vdwg.mxu0
  %101 = vmatpush.msra.mxu0 0.0
  %102 = vmatpush.msra.mxu0 0.0
  %103 = vmatpush.msra.mxu0 0.0
  %104 = vmatpush.msra.mxu0 0.0
  %105 = vmatpush.msra.mxu0 0.0
  %106 = vmatpush.msra.mxu0 0.0
  %107 = vmatpush.msra.mxu0 0.0
  %108 = vmatpush.msra.mxu0 0.0
  %109 = vmatpush.msra.mxu0 0.0
  %110 = vmatpush.msra.mxu0 0.0
  %111 = vmatpush.msra.mxu0 0.0
  %112 = vmatpush.msra.mxu0 %v56
  %113 = vmatpush.msra.mxu0 %v32
  %114 = vmatpush.msra.mxu0 %v28
  %115 = vmatpush.msra.mxu0 %v24
  %116 = vmatpush.msra.mxu0 %v20
  %117 = vmatmul.f32.gmra.mxu0 %v46
  %v118 = vpop.f32.mrf.mxu0
  %v119 = vadd.f32 %v42, %v118
  %120 = vdwg.mxu0
  %121 = vmatpush.msra.mxu0 0.0
  %122 = vmatpush.msra.mxu0 0.0
  %123 = vmatpush.msra.mxu0 0.0
  %124 = vmatpush.msra.mxu0 0.0
  %125 = vmatpush.msra.mxu0 0.0
  %126 = vmatpush.msra.mxu0 0.0
  %127 = vmatpush.msra.mxu0 0.0
  %128 = vmatpush.msra.mxu0 0.0
  %129 = vmatpush.msra.mxu0 0.0
  %130 = vmatpush.msra.mxu0 0.0
  %131 = vmatpush.msra.mxu0 0.0
  %132 = vmatpush.msra.mxu0 %v59
  %133 = vmatpush.msra.mxu0 %v33
  %134 = vmatpush.msra.mxu0 %v29
  %135 = vmatpush.msra.mxu0 %v25
  %136 = vmatpush.msra.mxu0 %v21
  %137 = vmatmul.f32.gmra.mxu0 %v46
  %v138 = vpop.f32.mrf.mxu0
  %v139 = vadd.f32 %v42, %v138
  %140 = vdwg.mxu0
  %v141 = vmax.f32 %v79, 0.0
  %v142 = vmax.f32 %v99, 0.0
  %v143 = vmax.f32 %v119, 0.0
  %v144 = vmax.f32 %v139, 0.0
  %v145 = vld [vmem:[%s3] sm:$0xff]
  %v146 = vld [vmem:[%s3 + $0x8] sm:$0xff]
  %v147 = vld [vmem:[%s3 + $0x10] sm:$0xff]
  %v148 = vld [vmem:[%s3 + $0x18] sm:$0xff]
  %v149 = vld [vmem:[%s3 + $0x20] sm:$0xff]
  %v150 = vld [vmem:[%s3 + $0x28] sm:$0xff]
  %v151 = vld [vmem:[%s3 + $0x30] sm:$0xff]
  %v152 = vld [vmem:[%s3 + $0x38] sm:$0xff]
  %v153 = vld [vmem:[%s3 + $0x40] sm:$0xff]
  %v154 = vld [vmem:[%s3 + $0x48] sm:$0xff]
  %v155 = vld [vmem:[%s3 + $0x50] sm:$0xff]
  %v156 = vld [vmem:[%s3 + $0x58] sm:$0xff]
  %v157 = vld [vmem:[%s3 + $0x60] sm:$0xff]
  %v158 = vld [vmem:[%s3 + $0x68] sm:$0xff]
  %v159 = vld [vmem:[%s3 + $0x70] sm:$0xff]
  %v160 = vld [vmem:[%s3 + $0x78] sm:$0xff]
  %v161 = vld [vmem:[%s3 + $0x80] sm:$0xff]
  %v162 = vld [vmem:[%s3 + $0x88] sm:$0xff]
  %v163 = vld [vmem:[%s3 + $0x90] sm:$0xff]
  %v164 = vld [vmem:[%s3 + $0x98] sm:$0xff]
  %v165 = vld [vmem:[%s3 + $0xa0] sm:$0xff]
  %v166 = vld [vmem:[%s3 + $0xa8] sm:$0xff]
  %v167 = vld [vmem:[%s3 + $0xb0] sm:$0xff]
  %v168 = vld [vmem:[%s3 + $0xb8] sm:$0xff]
  %v169 = vld [vmem:[%s3 + $0xc0] sm:$0xff]
  %v170 = vld [vmem:[%s3 + $0xc8] sm:$0xff]
  %v171 = vld [vmem:[%s3 + $0xd0] sm:$0xff]
  %v172 = vld [vmem:[%s3 + $0xd8] sm:$0xff]
  %v173 = vld [vmem:[%s3 + $0xe0] sm:$0xff]
  %v174 = vld [vmem:[%s3 + $0xe8] sm:$0xff]
  %v175 = vld [vmem:[%s3 + $0xf0] sm:$0xff]
  %v176 = vld [vmem:[%s3 + $0xf8] sm:$0xff]
  %v177 = vld [vmem:[%s3 + $0x100] sm:$0xff]
  %v178 = vld [vmem:[%s3 + $0x108] sm:$0xff]
  %v179 = vld [vmem:[%s3 + $0x110] sm:$0xff]
  %v180 = vld [vmem:[%s3 + $0x118] sm:$0xff]
  %v181 = vld [vmem:[%s3 + $0x120] sm:$0xff]
  %v182 = vld [vmem:[%s3 + $0x128] sm:$0xff]
  %v183 = vld [vmem:[%s3 + $0x130] sm:$0xff]
  %v184 = vld [vmem:[%s3 + $0x138] sm:$0xff]
  %v185 = vld [vmem:[%s3 + $0x140] sm:$0xff]
  %v186 = vld [vmem:[%s3 + $0x148] sm:$0xff]
  %v187 = vld [vmem:[%s3 + $0x150] sm:$0xff]
  %v188 = vld [vmem:[%s3 + $0x158] sm:$0xff]
  %v189 = vld [vmem:[%s3 + $0x160] sm:$0xff]
  %v190 = vld [vmem:[%s3 + $0x168] sm:$0xff]
  %v191 = vld [vmem:[%s3 + $0x170] sm:$0xff]
  %v192 = vld [vmem:[%s3 + $0x178] sm:$0xff]
  %v193 = vld [vmem:[%s3 + $0x180] sm:$0xff]
  %v194 = vld [vmem:[%s3 + $0x188] sm:$0xff]
  %v195 = vld [vmem:[%s3 + $0x190] sm:$0xff]
  %v196 = vld [vmem:[%s3 + $0x198] sm:$0xff]
  %v197 = vld [vmem:[%s3 + $0x1a0] sm:$0xff]
  %v198 = vld [vmem:[%s3 + $0x1a8] sm:$0xff]
  %v199 = vld [vmem:[%s3 + $0x1b0] sm:$0xff]
  %v200 = vld [vmem:[%s3 + $0x1b8] sm:$0xff]
  %v201 = vld [vmem:[%s3 + $0x1c0] sm:$0xff]
  %v202 = vld [vmem:[%s3 + $0x1c8] sm:$0xff]
  %v203 = vld [vmem:[%s3 + $0x1d0] sm:$0xff]
  %v204 = vld [vmem:[%s3 + $0x1d8] sm:$0xff]
  %v205 = vld [vmem:[%s3 + $0x1e0] sm:$0xff]
  %v206 = vld [vmem:[%s3 + $0x1e8] sm:$0xff]
  %v207 = vld [vmem:[%s3 + $0x1f0] sm:$0xff]
  %v208 = vld [vmem:[%s3 + $0x1f8] sm:$0xff]
  %v209 = vld [vmem:[%s3 + $0x200] sm:$0xff]
  %v210 = vld [vmem:[%s3 + $0x208] sm:$0xff]
  %v211 = vld [vmem:[%s3 + $0x210] sm:$0xff]
  %v212 = vld [vmem:[%s3 + $0x218] sm:$0xff]
  %v213 = vld [vmem:[%s3 + $0x220] sm:$0xff]
  %v214 = vld [vmem:[%s3 + $0x228] sm:$0xff]
  %v215 = vld [vmem:[%s3 + $0x230] sm:$0xff]
  %v216 = vld [vmem:[%s3 + $0x238] sm:$0xff]
  %v217 = vld [vmem:[%s3 + $0x240] sm:$0xff]
  %v218 = vld [vmem:[%s3 + $0x248] sm:$0xff]
  %v219 = vld [vmem:[%s3 + $0x250] sm:$0xff]
  %v220 = vld [vmem:[%s3 + $0x258] sm:$0xff]
  %v221 = vld [vmem:[%s3 + $0x260] sm:$0xff]
  %v222 = vld [vmem:[%s3 + $0x268] sm:$0xff]
  %v223 = vld [vmem:[%s3 + $0x270] sm:$0xff]
  %v224 = vld [vmem:[%s3 + $0x278] sm:$0xff]
  %v225 = vld [vmem:[%s3 + $0x280] sm:$0xff]
  %v226 = vld [vmem:[%s3 + $0x288] sm:$0xff]
  %v227 = vld [vmem:[%s3 + $0x290] sm:$0xff]
  %v228 = vld [vmem:[%s3 + $0x298] sm:$0xff]
  %v229 = vld [vmem:[%s3 + $0x2a0] sm:$0xff]
  %v230 = vld [vmem:[%s3 + $0x2a8] sm:$0xff]
  %v231 = vld [vmem:[%s3 + $0x2b0] sm:$0xff]
  %v232 = vld [vmem:[%s3 + $0x2b8] sm:$0xff]
  %v233 = vld [vmem:[%s3 + $0x2c0] sm:$0xff]
  %v234 = vld [vmem:[%s3 + $0x2c8] sm:$0xff]
  %v235 = vld [vmem:[%s3 + $0x2d0] sm:$0xff]
  %v236 = vld [vmem:[%s3 + $0x2d8] sm:$0xff]
  %v237 = vld [vmem:[%s3 + $0x2e0] sm:$0xff]
  %v238 = vld [vmem:[%s3 + $0x2e8] sm:$0xff]
  %v239 = vld [vmem:[%s3 + $0x2f0] sm:$0xff]
  %v240 = vld [vmem:[%s3 + $0x2f8] sm:$0xff]
  %v241 = vld [vmem:[%s3 + $0x300] sm:$0xff]
  %v242 = vld [vmem:[%s3 + $0x308] sm:$0xff]
  %v243 = vld [vmem:[%s3 + $0x310] sm:$0xff]
  %v244 = vld [vmem:[%s3 + $0x318] sm:$0xff]
  %v245 = vld [vmem:[%s3 + $0x320] sm:$0xff]
  %v246 = vld [vmem:[%s3 + $0x328] sm:$0xff]
  %v247 = vld [vmem:[%s3 + $0x330] sm:$0xff]
  %v248 = vld [vmem:[%s3 + $0x338] sm:$0xff]
  %v249 = vld [vmem:[%s3 + $0x340] sm:$0xff]
  %v250 = vld [vmem:[%s3 + $0x348] sm:$0xff]
  %v251 = vld [vmem:[%s3 + $0x350] sm:$0xff]
  %v252 = vld [vmem:[%s3 + $0x358] sm:$0xff]
  %v253 = vld [vmem:[%s3 + $0x360] sm:$0xff]
  %v254 = vld [vmem:[%s3 + $0x368] sm:$0xff]
  %v255 = vld [vmem:[%s3 + $0x370] sm:$0xff]
  %v256 = vld [vmem:[%s3 + $0x378] sm:$0xff]
  %v257 = vld [vmem:[%s3 + $0x380] sm:$0xff]
  %v258 = vld [vmem:[%s3 + $0x388] sm:$0xff]
  %v259 = vld [vmem:[%s3 + $0x390] sm:$0xff]
  %v260 = vld [vmem:[%s3 + $0x398] sm:$0xff]
  %v261 = vld [vmem:[%s3 + $0x3a0] sm:$0xff]
  %v262 = vld [vmem:[%s3 + $0x3a8] sm:$0xff]
  %v263 = vld [vmem:[%s3 + $0x3b0] sm:$0xff]
  %v264 = vld [vmem:[%s3 + $0x3b8] sm:$0xff]
  %v265 = vld [vmem:[%s3 + $0x3c0] sm:$0xff]
  %v266 = vld [vmem:[%s3 + $0x3c8] sm:$0xff]
  %v267 = vld [vmem:[%s3 + $0x3d0] sm:$0xff]
  %v268 = vld [vmem:[%s3 + $0x3d8] sm:$0xff]
  %v269 = vld [vmem:[%s3 + $0x3e0] sm:$0xff]
  %v270 = vld [vmem:[%s3 + $0x3e8] sm:$0xff]
  %v271 = vld [vmem:[%s3 + $0x3f0] sm:$0xff]
  %v272 = vld [vmem:[%s3 + $0x3f8] sm:$0xff]
  %v273 = vld [vmem:[%s3 + $0x400] sm:$0xff]
  %v274 = vld [vmem:[%s3 + $0x408] sm:$0xff]
  %v275 = vld [vmem:[%s3 + $0x410] sm:$0xff]
  %v276 = vld [vmem:[%s3 + $0x418] sm:$0xff]
  %v277 = vld [vmem:[%s3 + $0x420] sm:$0xff]
  %v278 = vld [vmem:[%s3 + $0x428] sm:$0xff]
  %v279 = vld [vmem:[%s3 + $0x430] sm:$0xff]
  %v280 = vld [vmem:[%s3 + $0x438] sm:$0xff]
  %v281 = vld [vmem:[%s3 + $0x440] sm:$0xff]
  %v282 = vld [vmem:[%s3 + $0x448] sm:$0xff]
  %v283 = vld [vmem:[%s3 + $0x450] sm:$0xff]
  %v284 = vld [vmem:[%s3 + $0x458] sm:$0xff]
  %v285 = vld [vmem:[%s3 + $0x460] sm:$0xff]
  %v286 = vld [vmem:[%s3 + $0x468] sm:$0xff]
  %v287 = vld [vmem:[%s3 + $0x470] sm:$0xff]
  %v288 = vld [vmem:[%s3 + $0x478] sm:$0xff]
  %v289 = vld [vmem:[%s3 + $0x480] sm:$0xff]
  %v290 = vld [vmem:[%s3 + $0x488] sm:$0xff]
  %v291 = vld [vmem:[%s3 + $0x490] sm:$0xff]
  %v292 = vld [vmem:[%s3 + $0x498] sm:$0xff]
  %v293 = vld [vmem:[%s3 + $0x4a0] sm:$0xff]
  %v294 = vld [vmem:[%s3 + $0x4a8] sm:$0xff]
  %v295 = vld [vmem:[%s3 + $0x4b0] sm:$0xff]
  %v296 = vld [vmem:[%s3 + $0x4b8] sm:$0xff]
  %v297 = vld [vmem:[%s3 + $0x4c0] sm:$0xff]
  %v298 = vld [vmem:[%s3 + $0x4c8] sm:$0xff]
  %v299 = vld [vmem:[%s3 + $0x4d0] sm:$0xff]
  %v300 = vld [vmem:[%s3 + $0x4d8] sm:$0xff]
  %v301 = vld [vmem:[%s3 + $0x4e0] sm:$0xff]
  %v302 = vld [vmem:[%s3 + $0x4e8] sm:$0xff]
  %v303 = vld [vmem:[%s3 + $0x4f0] sm:$0xff]
  %v304 = vld [vmem:[%s3 + $0x4f8] sm:$0xff]
  %v305 = vld [vmem:[%s3 + $0x500] sm:$0xff]
  %v306 = vld [vmem:[%s3 + $0x508] sm:$0xff]
  %v307 = vld [vmem:[%s3 + $0x510] sm:$0xff]
  %v308 = vld [vmem:[%s3 + $0x518] sm:$0xff]
  %v309 = vld [vmem:[%s3 + $0x520] sm:$0xff]
  %v310 = vld [vmem:[%s3 + $0x528] sm:$0xff]
  %v311 = vld [vmem:[%s3 + $0x530] sm:$0xff]
  %v312 = vld [vmem:[%s3 + $0x538] sm:$0xff]
  %v313 = vld [vmem:[%s3 + $0x540] sm:$0xff]
  %v314 = vld [vmem:[%s3 + $0x548] sm:$0xff]
  %v315 = vld [vmem:[%s3 + $0x550] sm:$0xff]
  %v316 = vld [vmem:[%s3 + $0x558] sm:$0xff]
  %v317 = vld [vmem:[%s3 + $0x560] sm:$0xff]
  %v318 = vld [vmem:[%s3 + $0x568] sm:$0xff]
  %v319 = vld [vmem:[%s3 + $0x570] sm:$0xff]
  %v320 = vld [vmem:[%s3 + $0x578] sm:$0xff]
  %v321 = vld [vmem:[%s3 + $0x580] sm:$0xff]
  %v322 = vld [vmem:[%s3 + $0x588] sm:$0xff]
  %v323 = vld [vmem:[%s3 + $0x590] sm:$0xff]
  %v324 = vld [vmem:[%s3 + $0x598] sm:$0xff]
  %v325 = vld [vmem:[%s3 + $0x5a0] sm:$0xff]
  %v326 = vld [vmem:[%s3 + $0x5a8] sm:$0xff]
  %v327 = vld [vmem:[%s3 + $0x5b0] sm:$0xff]
  %v328 = vld [vmem:[%s3 + $0x5b8] sm:$0xff]
  %v329 = vld [vmem:[%s3 + $0x5c0] sm:$0xff]
  %v330 = vld [vmem:[%s3 + $0x5c8] sm:$0xff]
  %v331 = vld [vmem:[%s3 + $0x5d0] sm:$0xff]
  %v332 = vld [vmem:[%s3 + $0x5d8] sm:$0xff]
  %v333 = vld [vmem:[%s3 + $0x5e0] sm:$0xff]
  %v334 = vld [vmem:[%s3 + $0x5e8] sm:$0xff]
  %v335 = vld [vmem:[%s3 + $0x5f0] sm:$0xff]
  %v336 = vld [vmem:[%s3 + $0x5f8] sm:$0xff]
  %v337 = vld [vmem:[%s3 + $0x600] sm:$0xff]
  %v338 = vld [vmem:[%s3 + $0x608] sm:$0xff]
  %v339 = vld [vmem:[%s3 + $0x610] sm:$0xff]
  %v340 = vld [vmem:[%s3 + $0x618] sm:$0xff]
  %v341 = vld [vmem:[%s3 + $0x620] sm:$0xff]
  %v342 = vld [vmem:[%s3 + $0x628] sm:$0xff]
  %v343 = vld [vmem:[%s3 + $0x630] sm:$0xff]
  %v344 = vld [vmem:[%s3 + $0x638] sm:$0xff]
  %v345 = vld [vmem:[%s3 + $0x640] sm:$0xff]
  %v346 = vld [vmem:[%s3 + $0x648] sm:$0xff]
  %v347 = vld [vmem:[%s3 + $0x650] sm:$0xff]
  %v348 = vld [vmem:[%s3 + $0x658] sm:$0xff]
  %v349 = vld [vmem:[%s3 + $0x660] sm:$0xff]
  %v350 = vld [vmem:[%s3 + $0x668] sm:$0xff]
  %v351 = vld [vmem:[%s3 + $0x670] sm:$0xff]
  %v352 = vld [vmem:[%s3 + $0x678] sm:$0xff]
  %v353 = vld [vmem:[%s3 + $0x680] sm:$0xff]
  %v354 = vld [vmem:[%s3 + $0x688] sm:$0xff]
  %v355 = vld [vmem:[%s3 + $0x690] sm:$0xff]
  %v356 = vld [vmem:[%s3 + $0x698] sm:$0xff]
  %v357 = vld [vmem:[%s3 + $0x6a0] sm:$0xff]
  %v358 = vld [vmem:[%s3 + $0x6a8] sm:$0xff]
  %v359 = vld [vmem:[%s3 + $0x6b0] sm:$0xff]
  %v360 = vld [vmem:[%s3 + $0x6b8] sm:$0xff]
  %v361 = vld [vmem:[%s3 + $0x6c0] sm:$0xff]
  %v362 = vld [vmem:[%s3 + $0x6c8] sm:$0xff]
  %v363 = vld [vmem:[%s3 + $0x6d0] sm:$0xff]
  %v364 = vld [vmem:[%s3 + $0x6d8] sm:$0xff]
  %v365 = vld [vmem:[%s3 + $0x6e0] sm:$0xff]
  %v366 = vld [vmem:[%s3 + $0x6e8] sm:$0xff]
  %v367 = vld [vmem:[%s3 + $0x6f0] sm:$0xff]
  %v368 = vld [vmem:[%s3 + $0x6f8] sm:$0xff]
  %v369 = vld [vmem:[%s3 + $0x700] sm:$0xff]
  %v370 = vld [vmem:[%s3 + $0x708] sm:$0xff]
  %v371 = vld [vmem:[%s3 + $0x710] sm:$0xff]
  %v372 = vld [vmem:[%s3 + $0x718] sm:$0xff]
  %v373 = vld [vmem:[%s3 + $0x720] sm:$0xff]
  %v374 = vld [vmem:[%s3 + $0x728] sm:$0xff]
  %v375 = vld [vmem:[%s3 + $0x730] sm:$0xff]
  %v376 = vld [vmem:[%s3 + $0x738] sm:$0xff]
  %v377 = vld [vmem:[%s3 + $0x740] sm:$0xff]
  %v378 = vld [vmem:[%s3 + $0x748] sm:$0xff]
  %v379 = vld [vmem:[%s3 + $0x750] sm:$0xff]
  %v380 = vld [vmem:[%s3 + $0x758] sm:$0xff]
  %v381 = vld [vmem:[%s3 + $0x760] sm:$0xff]
  %v382 = vld [vmem:[%s3 + $0x768] sm:$0xff]
  %v383 = vld [vmem:[%s3 + $0x770] sm:$0xff]
  %v384 = vld [vmem:[%s3 + $0x778] sm:$0xff]
  %v385 = vld [vmem:[%s3 + $0x780] sm:$0xff]
  %v386 = vld [vmem:[%s3 + $0x788] sm:$0xff]
  %v387 = vld [vmem:[%s3 + $0x790] sm:$0xff]
  %v388 = vld [vmem:[%s3 + $0x798] sm:$0xff]
  %v389 = vld [vmem:[%s3 + $0x7a0] sm:$0xff]
  %v390 = vld [vmem:[%s3 + $0x7a8] sm:$0xff]
  %v391 = vld [vmem:[%s3 + $0x7b0] sm:$0xff]
  %v392 = vld [vmem:[%s3 + $0x7b8] sm:$0xff]
  %v393 = vld [vmem:[%s3 + $0x7c0] sm:$0xff]
  %v394 = vld [vmem:[%s3 + $0x7c8] sm:$0xff]
  %v395 = vld [vmem:[%s3 + $0x7d0] sm:$0xff]
  %v396 = vld [vmem:[%s3 + $0x7d8] sm:$0xff]
  %v397 = vld [vmem:[%s3 + $0x7e0] sm:$0xff]
  %v398 = vld [vmem:[%s3 + $0x7e8] sm:$0xff]
  %v399 = vld [vmem:[%s3 + $0x7f0] sm:$0xff]
  %v400 = vld [vmem:[%s3 + $0x7f8] sm:$0xff]
  %401 = vmatpush.msra.mxu0 %v265
  %402 = vmatpush.msra.mxu0 %v257
  %403 = vmatpush.msra.mxu0 %v249
  %404 = vmatpush.msra.mxu0 %v241
  %405 = vmatpush.msra.mxu0 %v233
  %406 = vmatpush.msra.mxu0 %v225
  %407 = vmatpush.msra.mxu0 %v217
  %408 = vmatpush.msra.mxu0 %v209
  %409 = vmatpush.msra.mxu0 %v201
  %410 = vmatpush.msra.mxu0 %v193
  %411 = vmatpush.msra.mxu0 %v185
  %412 = vmatpush.msra.mxu0 %v177
  %413 = vmatpush.msra.mxu0 %v169
  %414 = vmatpush.msra.mxu0 %v161
  %415 = vmatpush.msra.mxu0 %v153
  %416 = vmatpush.msra.mxu0 %v145
  %417 = vmatmul.f32.gmra.mxu0 %v141
  %v418 = vpop.f32.mrf.mxu0
  %v419 = vadd.f32 0.0, %v418
  %420 = vdwg.mxu0
  %421 = vmatpush.msra.mxu0 %v393
  %422 = vmatpush.msra.mxu0 %v385
  %423 = vmatpush.msra.mxu0 %v377
  %424 = vmatpush.msra.mxu0 %v369
  %425 = vmatpush.msra.mxu0 %v361
  %426 = vmatpush.msra.mxu0 %v353
  %427 = vmatpush.msra.mxu0 %v345
  %428 = vmatpush.msra.mxu0 %v337
  %429 = vmatpush.msra.mxu0 %v329
  %430 = vmatpush.msra.mxu0 %v321
  %431 = vmatpush.msra.mxu0 %v313
  %432 = vmatpush.msra.mxu0 %v305
  %433 = vmatpush.msra.mxu0 %v297
  %434 = vmatpush.msra.mxu0 %v289
  %435 = vmatpush.msra.mxu0 %v281
  %436 = vmatpush.msra.mxu0 %v273
  %437 = vmatmul.f32.gmra.mxu0 %v142
  %v438 = vpop.f32.mrf.mxu0
  %v439 = vadd.f32 %v419, %v438
  %440 = vdwg.mxu0
  %441 = vmatpush.msra.mxu0 %v266
  %442 = vmatpush.msra.mxu0 %v258
  %443 = vmatpush.msra.mxu0 %v250
  %444 = vmatpush.msra.mxu0 %v242
  %445 = vmatpush.msra.mxu0 %v234
  %446 = vmatpush.msra.mxu0 %v226
  %447 = vmatpush.msra.mxu0 %v218
  %448 = vmatpush.msra.mxu0 %v210
  %449 = vmatpush.msra.mxu0 %v202
  %450 = vmatpush.msra.mxu0 %v194
  %451 = vmatpush.msra.mxu0 %v186
  %452 = vmatpush.msra.mxu0 %v178
  %453 = vmatpush.msra.mxu0 %v170
  %454 = vmatpush.msra.mxu0 %v162
  %455 = vmatpush.msra.mxu0 %v154
  %456 = vmatpush.msra.mxu0 %v146
  %457 = vmatmul.f32.gmra.mxu0 %v141
  %v458 = vpop.f32.mrf.mxu0
  %v459 = vadd.f32 0.0, %v458
  %460 = vdwg.mxu0
  %461 = vmatpush.msra.mxu0 %v394
  %462 = vmatpush.msra.mxu0 %v386
  %463 = vmatpush.msra.mxu0 %v378
  %464 = vmatpush.msra.mxu0 %v370
  %465 = vmatpush.msra.mxu0 %v362
  %466 = vmatpush.msra.mxu0 %v354
  %467 = vmatpush.msra.mxu0 %v346
  %468 = vmatpush.msra.mxu0 %v338
  %469 = vmatpush.msra.mxu0 %v330
  %470 = vmatpush.msra.mxu0 %v322
  %471 = vmatpush.msra.mxu0 %v314
  %472 = vmatpush.msra.mxu0 %v306
  %473 = vmatpush.msra.mxu0 %v298
  %474 = vmatpush.msra.mxu0 %v290
  %475 = vmatpush.msra.mxu0 %v282
  %476 = vmatpush.msra.mxu0 %v274
  %477 = vmatmul.f32.gmra.mxu0 %v142
  %v478 = vpop.f32.mrf.mxu0
  %v479 = vadd.f32 %v459, %v478
  %480 = vdwg.mxu0
  %481 = vmatpush.msra.mxu0 %v267
  %482 = vmatpush.msra.mxu0 %v259
  %483 = vmatpush.msra.mxu0 %v251
  %484 = vmatpush.msra.mxu0 %v243
  %485 = vmatpush.msra.mxu0 %v235
  %486 = vmatpush.msra.mxu0 %v227
  %487 = vmatpush.msra.mxu0 %v219
  %488 = vmatpush.msra.mxu0 %v211
  %489 = vmatpush.msra.mxu0 %v203
  %490 = vmatpush.msra.mxu0 %v195
  %491 = vmatpush.msra.mxu0 %v187
  %492 = vmatpush.msra.mxu0 %v179
  %493 = vmatpush.msra.mxu0 %v171
  %494 = vmatpush.msra.mxu0 %v163
  %495 = vmatpush.msra.mxu0 %v155
  %496 = vmatpush.msra.mxu0 %v147
  %497 = vmatmul.f32.gmra.mxu0 %v141
  %v498 = vpop.f32.mrf.mxu0
  %v499 = vadd.f32 0.0, %v498
  %500 = vdwg.mxu0
  %501 = vmatpush.msra.mxu0 %v395
  %502 = vmatpush.msra.mxu0 %v387
  %503 = vmatpush.msra.mxu0 %v379
  %504 = vmatpush.msra.mxu0 %v371
  %505 = vmatpush.msra.mxu0 %v363
  %506 = vmatpush.msra.mxu0 %v355
  %507 = vmatpush.msra.mxu0 %v347
  %508 = vmatpush.msra.mxu0 %v339
  %509 = vmatpush.msra.mxu0 %v331
  %510 = vmatpush.msra.mxu0 %v323
  %511 = vmatpush.msra.mxu0 %v315
  %512 = vmatpush.msra.mxu0 %v307
  %513 = vmatpush.msra.mxu0 %v299
  %514 = vmatpush.msra.mxu0 %v291
  %515 = vmatpush.msra.mxu0 %v283
  %516 = vmatpush.msra.mxu0 %v275
  %517 = vmatmul.f32.gmra.mxu0 %v142
  %v518 = vpop.f32.mrf.mxu0
  %v519 = vadd.f32 %v499, %v518
  %520 = vdwg.mxu0
  %521 = vmatpush.msra.mxu0 %v268
  %522 = vmatpush.msra.mxu0 %v260
  %523 = vmatpush.msra.mxu0 %v252
  %524 = vmatpush.msra.mxu0 %v244
  %525 = vmatpush.msra.mxu0 %v236
  %526 = vmatpush.msra.mxu0 %v228
  %527 = vmatpush.msra.mxu0 %v220
  %528 = vmatpush.msra.mxu0 %v212
  %529 = vmatpush.msra.mxu0 %v204
  %530 = vmatpush.msra.mxu0 %v196
  %531 = vmatpush.msra.mxu0 %v188
  %532 = vmatpush.msra.mxu0 %v180
  %533 = vmatpush.msra.mxu0 %v172
  %534 = vmatpush.msra.mxu0 %v164
  %535 = vmatpush.msra.mxu0 %v156
  %536 = vmatpush.msra.mxu0 %v148
  %537 = vmatmul.f32.gmra.mxu0 %v141
  %v538 = vpop.f32.mrf.mxu0
  %v539 = vadd.f32 0.0, %v538
  %540 = vdwg.mxu0
  %541 = vmatpush.msra.mxu0 %v396
  %542 = vmatpush.msra.mxu0 %v388
  %543 = vmatpush.msra.mxu0 %v380
  %544 = vmatpush.msra.mxu0 %v372
  %545 = vmatpush.msra.mxu0 %v364
  %546 = vmatpush.msra.mxu0 %v356
  %547 = vmatpush.msra.mxu0 %v348
  %548 = vmatpush.msra.mxu0 %v340
  %549 = vmatpush.msra.mxu0 %v332
  %550 = vmatpush.msra.mxu0 %v324
  %551 = vmatpush.msra.mxu0 %v316
  %552 = vmatpush.msra.mxu0 %v308
  %553 = vmatpush.msra.mxu0 %v300
  %554 = vmatpush.msra.mxu0 %v292
  %555 = vmatpush.msra.mxu0 %v284
  %556 = vmatpush.msra.mxu0 %v276
  %557 = vmatmul.f32.gmra.mxu0 %v142
  %v558 = vpop.f32.mrf.mxu0
  %v559 = vadd.f32 %v539, %v558
  %560 = vdwg.mxu0
  %561 = vmatpush.msra.mxu0 %v269
  %562 = vmatpush.msra.mxu0 %v261
  %563 = vmatpush.msra.mxu0 %v253
  %564 = vmatpush.msra.mxu0 %v245
  %565 = vmatpush.msra.mxu0 %v237
  %566 = vmatpush.msra.mxu0 %v229
  %567 = vmatpush.msra.mxu0 %v221
  %568 = vmatpush.msra.mxu0 %v213
  %569 = vmatpush.msra.mxu0 %v205
  %570 = vmatpush.msra.mxu0 %v197
  %571 = vmatpush.msra.mxu0 %v189
  %572 = vmatpush.msra.mxu0 %v181
  %573 = vmatpush.msra.mxu0 %v173
  %574 = vmatpush.msra.mxu0 %v165
  %575 = vmatpush.msra.mxu0 %v157
  %576 = vmatpush.msra.mxu0 %v149
  %577 = vmatmul.f32.gmra.mxu0 %v141
  %v578 = vpop.f32.mrf.mxu0
  %v579 = vadd.f32 0.0, %v578
  %580 = vdwg.mxu0
  %581 = vmatpush.msra.mxu0 %v397
  %582 = vmatpush.msra.mxu0 %v389
  %583 = vmatpush.msra.mxu0 %v381
  %584 = vmatpush.msra.mxu0 %v373
  %585 = vmatpush.msra.mxu0 %v365
  %586 = vmatpush.msra.mxu0 %v357
  %587 = vmatpush.msra.mxu0 %v349
  %588 = vmatpush.msra.mxu0 %v341
  %589 = vmatpush.msra.mxu0 %v333
  %590 = vmatpush.msra.mxu0 %v325
  %591 = vmatpush.msra.mxu0 %v317
  %592 = vmatpush.msra.mxu0 %v309
  %593 = vmatpush.msra.mxu0 %v301
  %594 = vmatpush.msra.mxu0 %v293
  %595 = vmatpush.msra.mxu0 %v285
  %596 = vmatpush.msra.mxu0 %v277
  %597 = vmatmul.f32.gmra.mxu0 %v142
  %v598 = vpop.f32.mrf.mxu0
  %v599 = vadd.f32 %v579, %v598
  %600 = vdwg.mxu0
  %601 = vmatpush.msra.mxu0 %v270
  %602 = vmatpush.msra.mxu0 %v262
  %603 = vmatpush.msra.mxu0 %v254
  %604 = vmatpush.msra.mxu0 %v246
  %605 = vmatpush.msra.mxu0 %v238
  %606 = vmatpush.msra.mxu0 %v230
  %607 = vmatpush.msra.mxu0 %v222
  %608 = vmatpush.msra.mxu0 %v214
  %609 = vmatpush.msra.mxu0 %v206
  %610 = vmatpush.msra.mxu0 %v198
  %611 = vmatpush.msra.mxu0 %v190
  %612 = vmatpush.msra.mxu0 %v182
  %613 = vmatpush.msra.mxu0 %v174
  %614 = vmatpush.msra.mxu0 %v166
  %615 = vmatpush.msra.mxu0 %v158
  %616 = vmatpush.msra.mxu0 %v150
  %617 = vmatmul.f32.gmra.mxu0 %v141
  %v618 = vpop.f32.mrf.mxu0
  %v619 = vadd.f32 0.0, %v618
  %620 = vdwg.mxu0
  %621 = vmatpush.msra.mxu0 %v398
  %622 = vmatpush.msra.mxu0 %v390
  %623 = vmatpush.msra.mxu0 %v382
  %624 = vmatpush.msra.mxu0 %v374
  %625 = vmatpush.msra.mxu0 %v366
  %626 = vmatpush.msra.mxu0 %v358
  %627 = vmatpush.msra.mxu0 %v350
  %628 = vmatpush.msra.mxu0 %v342
  %629 = vmatpush.msra.mxu0 %v334
  %630 = vmatpush.msra.mxu0 %v326
  %631 = vmatpush.msra.mxu0 %v318
  %632 = vmatpush.msra.mxu0 %v310
  %633 = vmatpush.msra.mxu0 %v302
  %634 = vmatpush.msra.mxu0 %v294
  %635 = vmatpush.msra.mxu0 %v286
  %636 = vmatpush.msra.mxu0 %v278
  %637 = vmatmul.f32.gmra.mxu0 %v142
  %v638 = vpop.f32.mrf.mxu0
  %v639 = vadd.f32 %v619, %v638
  %640 = vdwg.mxu0
  %641 = vmatpush.msra.mxu0 %v271
  %642 = vmatpush.msra.mxu0 %v263
  %643 = vmatpush.msra.mxu0 %v255
  %644 = vmatpush.msra.mxu0 %v247
  %645 = vmatpush.msra.mxu0 %v239
  %646 = vmatpush.msra.mxu0 %v231
  %647 = vmatpush.msra.mxu0 %v223
  %648 = vmatpush.msra.mxu0 %v215
  %649 = vmatpush.msra.mxu0 %v207
  %650 = vmatpush.msra.mxu0 %v199
  %651 = vmatpush.msra.mxu0 %v191
  %652 = vmatpush.msra.mxu0 %v183
  %653 = vmatpush.msra.mxu0 %v175
  %654 = vmatpush.msra.mxu0 %v167
  %655 = vmatpush.msra.mxu0 %v159
  %656 = vmatpush.msra.mxu0 %v151
  %657 = vmatmul.f32.gmra.mxu0 %v141
  %v658 = vpop.f32.mrf.mxu0
  %v659 = vadd.f32 0.0, %v658
  %660 = vdwg.mxu0
  %661 = vmatpush.msra.mxu0 %v399
  %662 = vmatpush.msra.mxu0 %v391
  %663 = vmatpush.msra.mxu0 %v383
  %664 = vmatpush.msra.mxu0 %v375
  %665 = vmatpush.msra.mxu0 %v367
  %666 = vmatpush.msra.mxu0 %v359
  %667 = vmatpush.msra.mxu0 %v351
  %668 = vmatpush.msra.mxu0 %v343
  %669 = vmatpush.msra.mxu0 %v335
  %670 = vmatpush.msra.mxu0 %v327
  %671 = vmatpush.msra.mxu0 %v319
  %672 = vmatpush.msra.mxu0 %v311
  %673 = vmatpush.msra.mxu0 %v303
  %674 = vmatpush.msra.mxu0 %v295
  %675 = vmatpush.msra.mxu0 %v287
  %676 = vmatpush.msra.mxu0 %v279
  %677 = vmatmul.f32.gmra.mxu0 %v142
  %v678 = vpop.f32.mrf.mxu0
  %v679 = vadd.f32 %v659, %v678
  %680 = vdwg.mxu0
  %681 = vmatpush.msra.mxu0 %v272
  %682 = vmatpush.msra.mxu0 %v264
  %683 = vmatpush.msra.mxu0 %v256
  %684 = vmatpush.msra.mxu0 %v248
  %685 = vmatpush.msra.mxu0 %v240
  %686 = vmatpush.msra.mxu0 %v232
  %687 = vmatpush.msra.mxu0 %v224
  %688 = vmatpush.msra.mxu0 %v216
  %689 = vmatpush.msra.mxu0 %v208
  %690 = vmatpush.msra.mxu0 %v200
  %691 = vmatpush.msra.mxu0 %v192
  %692 = vmatpush.msra.mxu0 %v184
  %693 = vmatpush.msra.mxu0 %v176
  %694 = vmatpush.msra.mxu0 %v168
  %695 = vmatpush.msra.mxu0 %v160
  %696 = vmatpush.msra.mxu0 %v152
  %697 = vmatmul.f32.gmra.mxu0 %v141
  %v698 = vpop.f32.mrf.mxu0
  %v699 = vadd.f32 0.0, %v698
  %700 = vdwg.mxu0
  %701 = vmatpush.msra.mxu0 %v400
  %702 = vmatpush.msra.mxu0 %v392
  %703 = vmatpush.msra.mxu0 %v384
  %704 = vmatpush.msra.mxu0 %v376
  %705 = vmatpush.msra.mxu0 %v368
  %706 = vmatpush.msra.mxu0 %v360
  %707 = vmatpush.msra.mxu0 %v352
  %708 = vmatpush.msra.mxu0 %v344
  %709 = vmatpush.msra.mxu0 %v336
  %710 = vmatpush.msra.mxu0 %v328
  %711 = vmatpush.msra.mxu0 %v320
  %712 = vmatpush.msra.mxu0 %v312
  %713 = vmatpush.msra.mxu0 %v304
  %714 = vmatpush.msra.mxu0 %v296
  %715 = vmatpush.msra.mxu0 %v288
  %716 = vmatpush.msra.mxu0 %v280
  %717 = vmatmul.f32.gmra.mxu0 %v142
  %v718 = vpop.f32.mrf.mxu0
  %v719 = vadd.f32 %v699, %v718
  %720 = vdwg.mxu0
  %721 = vst [vmem:[%s4] sm:$0xff] %v439
  %722 = vst [vmem:[%s4 + $0x8] sm:$0xff] %v479
  %723 = vst [vmem:[%s4 + $0x10] sm:$0xff] %v519
  %724 = vst [vmem:[%s4 + $0x18] sm:$0xff] %v559
  %725 = vst [vmem:[%s4 + $0x20] sm:$0xff] %v599
  %726 = vst [vmem:[%s4 + $0x28] sm:$0xff] %v639
  %727 = vst [vmem:[%s4 + $0x30] sm:$0xff] %v679
  %728 = vst [vmem:[%s4 + $0x38] sm:$0xff] %v719
  %729 = vmatpush.msra.mxu0 %v265
  %730 = vmatpush.msra.mxu0 %v257
  %731 = vmatpush.msra.mxu0 %v249
  %732 = vmatpush.msra.mxu0 %v241
  %733 = vmatpush.msra.mxu0 %v233
  %734 = vmatpush.msra.mxu0 %v225
  %735 = vmatpush.msra.mxu0 %v217
  %736 = vmatpush.msra.mxu0 %v209
  %737 = vmatpush.msra.mxu0 %v201
  %738 = vmatpush.msra.mxu0 %v193
  %739 = vmatpush.msra.mxu0 %v185
  %740 = vmatpush.msra.mxu0 %v177
  %741 = vmatpush.msra.mxu0 %v169
  %742 = vmatpush.msra.mxu0 %v161
  %743 = vmatpush.msra.mxu0 %v153
  %744 = vmatpush.msra.mxu0 %v145
  %745 = vmatmul.f32.gmra.mxu0 %v143
  %v746 = vpop.f32.mrf.mxu0
  %v747 = vadd.f32 0.0, %v746
  %748 = vdwg.mxu0
  %749 = vmatpush.msra.mxu0 %v393
  %750 = vmatpush.msra.mxu0 %v385
  %751 = vmatpush.msra.mxu0 %v377
  %752 = vmatpush.msra.mxu0 %v369
  %753 = vmatpush.msra.mxu0 %v361
  %754 = vmatpush.msra.mxu0 %v353
  %755 = vmatpush.msra.mxu0 %v345
  %756 = vmatpush.msra.mxu0 %v337
  %757 = vmatpush.msra.mxu0 %v329
  %758 = vmatpush.msra.mxu0 %v321
  %759 = vmatpush.msra.mxu0 %v313
  %760 = vmatpush.msra.mxu0 %v305
  %761 = vmatpush.msra.mxu0 %v297
  %762 = vmatpush.msra.mxu0 %v289
  %763 = vmatpush.msra.mxu0 %v281
  %764 = vmatpush.msra.mxu0 %v273
  %765 = vmatmul.f32.gmra.mxu0 %v144
  %v766 = vpop.f32.mrf.mxu0
  %v767 = vadd.f32 %v747, %v766
  %768 = vdwg.mxu0
  %769 = vmatpush.msra.mxu0 %v266
  %770 = vmatpush.msra.mxu0 %v258
  %771 = vmatpush.msra.mxu0 %v250
  %772 = vmatpush.msra.mxu0 %v242
  %773 = vmatpush.msra.mxu0 %v234
  %774 = vmatpush.msra.mxu0 %v226
  %775 = vmatpush.msra.mxu0 %v218
  %776 = vmatpush.msra.mxu0 %v210
  %777 = vmatpush.msra.mxu0 %v202
  %778 = vmatpush.msra.mxu0 %v194
  %779 = vmatpush.msra.mxu0 %v186
  %780 = vmatpush.msra.mxu0 %v178
  %781 = vmatpush.msra.mxu0 %v170
  %782 = vmatpush.msra.mxu0 %v162
  %783 = vmatpush.msra.mxu0 %v154
  %784 = vmatpush.msra.mxu0 %v146
  %785 = vmatmul.f32.gmra.mxu0 %v143
  %v786 = vpop.f32.mrf.mxu0
  %v787 = vadd.f32 0.0, %v786
  %788 = vdwg.mxu0
  %789 = vmatpush.msra.mxu0 %v394
  %790 = vmatpush.msra.mxu0 %v386
  %791 = vmatpush.msra.mxu0 %v378
  %792 = vmatpush.msra.mxu0 %v370
  %793 = vmatpush.msra.mxu0 %v362
  %794 = vmatpush.msra.mxu0 %v354
  %795 = vmatpush.msra.mxu0 %v346
  %796 = vmatpush.msra.mxu0 %v338
  %797 = vmatpush.msra.mxu0 %v330
  %798 = vmatpush.msra.mxu0 %v322
  %799 = vmatpush.msra.mxu0 %v314
  %800 = vmatpush.msra.mxu0 %v306
  %801 = vmatpush.msra.mxu0 %v298
  %802 = vmatpush.msra.mxu0 %v290
  %803 = vmatpush.msra.mxu0 %v282
  %804 = vmatpush.msra.mxu0 %v274
  %805 = vmatmul.f32.gmra.mxu0 %v144
  %v806 = vpop.f32.mrf.mxu0
  %v807 = vadd.f32 %v787, %v806
  %808 = vdwg.mxu0
  %809 = vmatpush.msra.mxu0 %v267
  %810 = vmatpush.msra.mxu0 %v259
  %811 = vmatpush.msra.mxu0 %v251
  %812 = vmatpush.msra.mxu0 %v243
  %813 = vmatpush.msra.mxu0 %v235
  %814 = vmatpush.msra.mxu0 %v227
  %815 = vmatpush.msra.mxu0 %v219
  %816 = vmatpush.msra.mxu0 %v211
  %817 = vmatpush.msra.mxu0 %v203
  %818 = vmatpush.msra.mxu0 %v195
  %819 = vmatpush.msra.mxu0 %v187
  %820 = vmatpush.msra.mxu0 %v179
  %821 = vmatpush.msra.mxu0 %v171
  %822 = vmatpush.msra.mxu0 %v163
  %823 = vmatpush.msra.mxu0 %v155
  %824 = vmatpush.msra.mxu0 %v147
  %825 = vmatmul.f32.gmra.mxu0 %v143
  %v826 = vpop.f32.mrf.mxu0
  %v827 = vadd.f32 0.0, %v826
  %828 = vdwg.mxu0
  %829 = vmatpush.msra.mxu0 %v395
  %830 = vmatpush.msra.mxu0 %v387
  %831 = vmatpush.msra.mxu0 %v379
  %832 = vmatpush.msra.mxu0 %v371
  %833 = vmatpush.msra.mxu0 %v363
  %834 = vmatpush.msra.mxu0 %v355
  %835 = vmatpush.msra.mxu0 %v347
  %836 = vmatpush.msra.mxu0 %v339
  %837 = vmatpush.msra.mxu0 %v331
  %838 = vmatpush.msra.mxu0 %v323
  %839 = vmatpush.msra.mxu0 %v315
  %840 = vmatpush.msra.mxu0 %v307
  %841 = vmatpush.msra.mxu0 %v299
  %842 = vmatpush.msra.mxu0 %v291
  %843 = vmatpush.msra.mxu0 %v283
  %844 = vmatpush.msra.mxu0 %v275
  %845 = vmatmul.f32.gmra.mxu0 %v144
  %v846 = vpop.f32.mrf.mxu0
  %v847 = vadd.f32 %v827, %v846
  %848 = vdwg.mxu0
  %849 = vmatpush.msra.mxu0 %v268
  %850 = vmatpush.msra.mxu0 %v260
  %851 = vmatpush.msra.mxu0 %v252
  %852 = vmatpush.msra.mxu0 %v244
  %853 = vmatpush.msra.mxu0 %v236
  %854 = vmatpush.msra.mxu0 %v228
  %855 = vmatpush.msra.mxu0 %v220
  %856 = vmatpush.msra.mxu0 %v212
  %857 = vmatpush.msra.mxu0 %v204
  %858 = vmatpush.msra.mxu0 %v196
  %859 = vmatpush.msra.mxu0 %v188
  %860 = vmatpush.msra.mxu0 %v180
  %861 = vmatpush.msra.mxu0 %v172
  %862 = vmatpush.msra.mxu0 %v164
  %863 = vmatpush.msra.mxu0 %v156
  %864 = vmatpush.msra.mxu0 %v148
  %865 = vmatmul.f32.gmra.mxu0 %v143
  %v866 = vpop.f32.mrf.mxu0
  %v867 = vadd.f32 0.0, %v866
  %868 = vdwg.mxu0
  %869 = vmatpush.msra.mxu0 %v396
  %870 = vmatpush.msra.mxu0 %v388
  %871 = vmatpush.msra.mxu0 %v380
  %872 = vmatpush.msra.mxu0 %v372
  %873 = vmatpush.msra.mxu0 %v364
  %874 = vmatpush.msra.mxu0 %v356
  %875 = vmatpush.msra.mxu0 %v348
  %876 = vmatpush.msra.mxu0 %v340
  %877 = vmatpush.msra.mxu0 %v332
  %878 = vmatpush.msra.mxu0 %v324
  %879 = vmatpush.msra.mxu0 %v316
  %880 = vmatpush.msra.mxu0 %v308
  %881 = vmatpush.msra.mxu0 %v300
  %882 = vmatpush.msra.mxu0 %v292
  %883 = vmatpush.msra.mxu0 %v284
  %884 = vmatpush.msra.mxu0 %v276
  %885 = vmatmul.f32.gmra.mxu0 %v144
  %v886 = vpop.f32.mrf.mxu0
  %v887 = vadd.f32 %v867, %v886
  %888 = vdwg.mxu0
  %889 = vmatpush.msra.mxu0 %v269
  %890 = vmatpush.msra.mxu0 %v261
  %891 = vmatpush.msra.mxu0 %v253
  %892 = vmatpush.msra.mxu0 %v245
  %893 = vmatpush.msra.mxu0 %v237
  %894 = vmatpush.msra.mxu0 %v229
  %895 = vmatpush.msra.mxu0 %v221
  %896 = vmatpush.msra.mxu0 %v213
  %897 = vmatpush.msra.mxu0 %v205
  %898 = vmatpush.msra.mxu0 %v197
  %899 = vmatpush.msra.mxu0 %v189
  %900 = vmatpush.msra.mxu0 %v181
  %901 = vmatpush.msra.mxu0 %v173
  %902 = vmatpush.msra.mxu0 %v165
  %903 = vmatpush.msra.mxu0 %v157
  %904 = vmatpush.msra.mxu0 %v149
  %905 = vmatmul.f32.gmra.mxu0 %v143
  %v906 = vpop.f32.mrf.mxu0
  %v907 = vadd.f32 0.0, %v906
  %908 = vdwg.mxu0
  %909 = vmatpush.msra.mxu0 %v397
  %910 = vmatpush.msra.mxu0 %v389
  %911 = vmatpush.msra.mxu0 %v381
  %912 = vmatpush.msra.mxu0 %v373
  %913 = vmatpush.msra.mxu0 %v365
  %914 = vmatpush.msra.mxu0 %v357
  %915 = vmatpush.msra.mxu0 %v349
  %916 = vmatpush.msra.mxu0 %v341
  %917 = vmatpush.msra.mxu0 %v333
  %918 = vmatpush.msra.mxu0 %v325
  %919 = vmatpush.msra.mxu0 %v317
  %920 = vmatpush.msra.mxu0 %v309
  %921 = vmatpush.msra.mxu0 %v301
  %922 = vmatpush.msra.mxu0 %v293
  %923 = vmatpush.msra.mxu0 %v285
  %924 = vmatpush.msra.mxu0 %v277
  %925 = vmatmul.f32.gmra.mxu0 %v144
  %v926 = vpop.f32.mrf.mxu0
  %v927 = vadd.f32 %v907, %v926
  %928 = vdwg.mxu0
  %929 = vmatpush.msra.mxu0 %v270
  %930 = vmatpush.msra.mxu0 %v262
  %931 = vmatpush.msra.mxu0 %v254
  %932 = vmatpush.msra.mxu0 %v246
  %933 = vmatpush.msra.mxu0 %v238
  %934 = vmatpush.msra.mxu0 %v230
  %935 = vmatpush.msra.mxu0 %v222
  %936 = vmatpush.msra.mxu0 %v214
  %937 = vmatpush.msra.mxu0 %v206
  %938 = vmatpush.msra.mxu0 %v198
  %939 = vmatpush.msra.mxu0 %v190
  %940 = vmatpush.msra.mxu0 %v182
  %941 = vmatpush.msra.mxu0 %v174
  %942 = vmatpush.msra.mxu0 %v166
  %943 = vmatpush.msra.mxu0 %v158
  %944 = vmatpush.msra.mxu0 %v150
  %945 = vmatmul.f32.gmra.mxu0 %v143
  %v946 = vpop.f32.mrf.mxu0
  %v947 = vadd.f32 0.0, %v946
  %948 = vdwg.mxu0
  %949 = vmatpush.msra.mxu0 %v398
  %950 = vmatpush.msra.mxu0 %v390
  %951 = vmatpush.msra.mxu0 %v382
  %952 = vmatpush.msra.mxu0 %v374
  %953 = vmatpush.msra.mxu0 %v366
  %954 = vmatpush.msra.mxu0 %v358
  %955 = vmatpush.msra.mxu0 %v350
  %956 = vmatpush.msra.mxu0 %v342
  %957 = vmatpush.msra.mxu0 %v334
  %958 = vmatpush.msra.mxu0 %v326
  %959 = vmatpush.msra.mxu0 %v318
  %960 = vmatpush.msra.mxu0 %v310
  %961 = vmatpush.msra.mxu0 %v302
  %962 = vmatpush.msra.mxu0 %v294
  %963 = vmatpush.msra.mxu0 %v286
  %964 = vmatpush.msra.mxu0 %v278
  %965 = vmatmul.f32.gmra.mxu0 %v144
  %v966 = vpop.f32.mrf.mxu0
  %v967 = vadd.f32 %v947, %v966
  %968 = vdwg.mxu0
  %969 = vmatpush.msra.mxu0 %v271
  %970 = vmatpush.msra.mxu0 %v263
  %971 = vmatpush.msra.mxu0 %v255
  %972 = vmatpush.msra.mxu0 %v247
  %973 = vmatpush.msra.mxu0 %v239
  %974 = vmatpush.msra.mxu0 %v231
  %975 = vmatpush.msra.mxu0 %v223
  %976 = vmatpush.msra.mxu0 %v215
  %977 = vmatpush.msra.mxu0 %v207
  %978 = vmatpush.msra.mxu0 %v199
  %979 = vmatpush.msra.mxu0 %v191
  %980 = vmatpush.msra.mxu0 %v183
  %981 = vmatpush.msra.mxu0 %v175
  %982 = vmatpush.msra.mxu0 %v167
  %983 = vmatpush.msra.mxu0 %v159
  %984 = vmatpush.msra.mxu0 %v151
  %985 = vmatmul.f32.gmra.mxu0 %v143
  %v986 = vpop.f32.mrf.mxu0
  %v987 = vadd.f32 0.0, %v986
  %988 = vdwg.mxu0
  %989 = vmatpush.msra.mxu0 %v399
  %990 = vmatpush.msra.mxu0 %v391
  %991 = vmatpush.msra.mxu0 %v383
  %992 = vmatpush.msra.mxu0 %v375
  %993 = vmatpush.msra.mxu0 %v367
  %994 = vmatpush.msra.mxu0 %v359
  %995 = vmatpush.msra.mxu0 %v351
  %996 = vmatpush.msra.mxu0 %v343
  %997 = vmatpush.msra.mxu0 %v335
  %998 = vmatpush.msra.mxu0 %v327
  %999 = vmatpush.msra.mxu0 %v319
  %1000 = vmatpush.msra.mxu0 %v311
  %1001 = vmatpush.msra.mxu0 %v303
  %1002 = vmatpush.msra.mxu0 %v295
  %1003 = vmatpush.msra.mxu0 %v287
  %1004 = vmatpush.msra.mxu0 %v279
  %1005 = vmatmul.f32.gmra.mxu0 %v144
  %v1006 = vpop.f32.mrf.mxu0
  %v1007 = vadd.f32 %v987, %v1006
  %1008 = vdwg.mxu0
  %1009 = vmatpush.msra.mxu0 %v272
  %1010 = vmatpush.msra.mxu0 %v264
  %1011 = vmatpush.msra.mxu0 %v256
  %1012 = vmatpush.msra.mxu0 %v248
  %1013 = vmatpush.msra.mxu0 %v240
  %1014 = vmatpush.msra.mxu0 %v232
  %1015 = vmatpush.msra.mxu0 %v224
  %1016 = vmatpush.msra.mxu0 %v216
  %1017 = vmatpush.msra.mxu0 %v208
  %1018 = vmatpush.msra.mxu0 %v200
  %1019 = vmatpush.msra.mxu0 %v192
  %1020 = vmatpush.msra.mxu0 %v184
  %1021 = vmatpush.msra.mxu0 %v176
  %1022 = vmatpush.msra.mxu0 %v168
  %1023 = vmatpush.msra.mxu0 %v160
  %1024 = vmatpush.msra.mxu0 %v152
  %1025 = vmatmul.f32.gmra.mxu0 %v143
  %v1026 = vpop.f32.mrf.mxu0
  %v1027 = vadd.f32 0.0, %v1026
  %1028 = vdwg.mxu0
  %1029 = vmatpush.msra.mxu0 %v400
  %1030 = vmatpush.msra.mxu0 %v392
  %1031 = vmatpush.msra.mxu0 %v384
  %1032 = vmatpush.msra.mxu0 %v376
  %1033 = vmatpush.msra.mxu0 %v368
  %1034 = vmatpush.msra.mxu0 %v360
  %1035 = vmatpush.msra.mxu0 %v352
  %1036 = vmatpush.msra.mxu0 %v344
  %1037 = vmatpush.msra.mxu0 %v336
  %1038 = vmatpush.msra.mxu0 %v328
  %1039 = vmatpush.msra.mxu0 %v320
  %1040 = vmatpush.msra.mxu0 %v312
  %1041 = vmatpush.msra.mxu0 %v304
  %1042 = vmatpush.msra.mxu0 %v296
  %1043 = vmatpush.msra.mxu0 %v288
  %1044 = vmatpush.msra.mxu0 %v280
  %1045 = vmatmul.f32.gmra.mxu0 %v144
  %v1046 = vpop.f32.mrf.mxu0
  %v1047 = vadd.f32 %v1027, %v1046
  %1048 = vdwg.mxu0
  %s1049 = scalar_lea.vmem %s4, 64
  %1050 = vst [vmem:[%s1049] sm:$0xff] %v767
  %1051 = vst [vmem:[%s1049 + $0x8] sm:$0xff] %v807
  %1052 = vst [vmem:[%s1049 + $0x10] sm:$0xff] %v847
  %1053 = vst [vmem:[%s1049 + $0x18] sm:$0xff] %v887
  %1054 = vst [vmem:[%s1049 + $0x20] sm:$0xff] %v927
  %1055 = vst [vmem:[%s1049 + $0x28] sm:$0xff] %v967
  %1056 = vst [vmem:[%s1049 + $0x30] sm:$0xff] %v1007
  %1057 = vst [vmem:[%s1049 + $0x38] sm:$0xff] %v1047
  // Predicated region
  $region18: #{decoder_block_forward.1} parent=0 // pred_check
    _
  $region19: #{decoder_block_forward.1} parent=0 // pred_check_branch
    %1059 = sbr.rel (0) target = $region21
  $region20: #{decoder_block_forward.1} parent=0 // pred_region
    _
  $region21: #{decoder_block_forward.1} parent=0 // pred_fallthru
    _
  // Predicated region
  $region22: #{decoder_block_forward.1} parent=0 // pred_check
    _
  $region23: #{decoder_block_forward.1} parent=0 // pred_check_branch
    %1061 = sbr.rel (0) target = $region25
  $region24: #{decoder_block_forward.1} parent=0 // pred_region
    _
  $region25: #{decoder_block_forward.1} parent=0 // pred_fallthru
    _

</llo_original>
